<compile_context>
chip_gen: v6e
topology: v6e:2x2x1
jax: 0.10.0
libtpu: 0.0.40
codegen_flags: <defaults>
</compile_context>

<pallas_src>
import functools

import jax
import jax.numpy as jnp
from jax.experimental import pallas as pl
from jax.experimental.pallas import tpu as pltpu


def _round_up(x, m):
    return ((x + m - 1) // m) * m


def _cdiv(a, b):
    return -(-a // b)


def mlp_kernel(x_ref, w1_ref, b1_ref, w2_ref, b2_ref, o_ref):
    # fc1: cast the f32 x tile to bf16 in VMEM, MXU bf16 x bf16 -> f32 acc.
    x = x_ref[...].astype(jnp.bfloat16)                       # (tm, K)
    h = jnp.dot(x, w1_ref[...], preferred_element_type=jnp.float32)
    h = jnp.maximum(h + b1_ref[...], 0.0)                     # ReLU (f32 bias)
    # Dropout (eval mode) -> identity.
    # fc2: (tm, H) bf16 @ (H, Np) bf16 -> f32; lane-dense output (Np = 128).
    y = jnp.dot(h.astype(jnp.bfloat16), w2_ref[...],
                preferred_element_type=jnp.float32)
    o_ref[...] = (y + b2_ref[...]).astype(o_ref.dtype)


@functools.partial(jax.jit, static_argnames=("out_dim",))
def mlp_forward(x, w1_t, b1, w2_t, b2, *, out_dim):
    """x: (B, in_dim) f32 (unpadded, uncast — kernel casts in VMEM).
    w1_t: (in_dim, H) bf16
    b1:   (1, H) f32
    w2_t: (H, out_pad) bf16  (zero-padded cols past out_dim)
    b2:   (1, out_pad) f32   (zero-padded)
    Returns (B, out_dim) f32.
    """
    B, in_dim = x.shape
    hidden = w1_t.shape[1]
    out_pad = w2_t.shape[1]

    # M tiling:
    #  * B >= 1024: 512-row tiles (>= ~90% of HBM roofline for f32 x tiles,
    #    grid_m >= 2 so both v7x TensorCores are busy).
    #  * 512 <= B < 1024: split into exactly two tiles for the 2-TC chip.
    #  * small B: single full-extent block (always legal; no batch padding,
    #    no extra wrapper dispatches).
    if B >= 1024:
        tile_m = 512
    elif B >= 512:
        tile_m = _round_up(_cdiv(B, 2), 16)
    else:
        tile_m = B

    b_pad = _round_up(B, tile_m)
    x_p = x if b_pad == B else jnp.pad(x, ((0, b_pad - B), (0, 0)))
    grid_m = b_pad // tile_m

    out = pl.pallas_call(
        mlp_kernel,
        out_shape=jax.ShapeDtypeStruct((b_pad, out_pad), jnp.float32),
        grid_spec=pltpu.PrefetchScalarGridSpec(
            num_scalar_prefetch=0,
            grid=(grid_m,),
            in_specs=[
                pl.BlockSpec((tile_m, in_dim), lambda i: (i, 0)),   # x tile (f32)
                pl.BlockSpec((in_dim, hidden), lambda i: (0, 0)),   # w1 resident
                pl.BlockSpec((1, hidden), lambda i: (0, 0)),        # b1 resident
                pl.BlockSpec((hidden, out_pad), lambda i: (0, 0)),  # w2 resident
                pl.BlockSpec((1, out_pad), lambda i: (0, 0)),       # b2 resident
            ],
            out_specs=pl.BlockSpec((tile_m, out_pad), lambda i: (i, 0)),
        ),
        compiler_params=pltpu.CompilerParams(
            dimension_semantics=("parallel",),   # shards M across v7x's 2 TCs
        ),
    )(x_p, w1_t, b1, w2_t, b2)

    # Semantically required slice back to (B, out_dim); consumers that can
    # take the padded 128-lane slab should skip this pass.
    return out[:B, :out_dim]


def xavier_normal(key, shape):
    # PyTorch nn.init.xavier_normal for Linear weight of shape (out, in):
    # std = sqrt(2 / (fan_in + fan_out))
    fan_out, fan_in = shape
    std = (2.0 / (fan_in + fan_out)) ** 0.5
    return std * jax.random.normal(key, shape, dtype=jnp.float32)


def init_mlp_params(key, in_dim=2050, hidden=128, out_dim=2):
    """Kernel-layout params: bf16 weights pre-transposed (w2 column-padded to
    the lane-dense output width), f32 biases (b2 padded likewise)."""
    k1, k2 = jax.random.split(key, 2)
    w1 = xavier_normal(k1, (hidden, in_dim))   # PyTorch layout (out, in)
    b1 = jnp.zeros((hidden,), jnp.float32)     # constant_(bias, 0)
    w2 = xavier_normal(k2, (out_dim, hidden))
    b2 = jnp.zeros((out_dim,), jnp.float32)

    out_pad = _round_up(out_dim, 128)

    w1_t = w1.T.astype(jnp.bfloat16)                                   # (in_dim, H)
    w2_t = jnp.pad(w2.T, ((0, 0), (0, out_pad - out_dim))).astype(jnp.bfloat16)
    b1_k = b1.reshape(1, hidden)
    b2_k = jnp.pad(b2, (0, out_pad - out_dim)).reshape(1, out_pad)
    return w1_t, b1_k, w2_t, b2_k


if __name__ == "__main__":
    key = jax.random.PRNGKey(0)
    kx, kp = jax.random.split(key)

    B, IN_DIM, HIDDEN, OUT_DIM = 8, 2050, 128, 2
    x = jax.random.normal(kx, (B, IN_DIM), dtype=jnp.float32)
    w1_t, b1, w2_t, b2 = init_mlp_params(kp, IN_DIM, HIDDEN, OUT_DIM)

    out = mlp_forward(x, w1_t, b1, w2_t, b2, out_dim=OUT_DIM)
    out = jax.block_until_ready(out)

    # Reference in plain JAX with matched bf16 rounding of the matmul operands
    # (kernel accumulates in f32 from bf16 operands; bf16 products are exact
    # in f32, so HIGHEST-precision reference matmuls match up to sum order).
    x_b = x.astype(jnp.bfloat16).astype(jnp.float32)
    w1_f = w1_t.astype(jnp.float32)
    w2_f = w2_t.astype(jnp.float32)[:, :OUT_DIM]
    h_ref = jnp.maximum(
        jnp.dot(x_b, w1_f, precision=jax.lax.Precision.HIGHEST) + b1, 0.0)
    h_ref = h_ref.astype(jnp.bfloat16).astype(jnp.float32)
    ref = jnp.dot(h_ref, w2_f,
                  precision=jax.lax.Precision.HIGHEST) + b2[:, :OUT_DIM]

    assert out.shape == (B, OUT_DIM)
    assert jnp.allclose(out, ref, atol=1e-3, rtol=1e-3), (
        float(jnp.max(jnp.abs(out - ref))))

    print("KERNEL_OK")
</pallas_src>

<mosaic_0001>
module attributes {stable_mosaic.version = 11 : i64} {
  func.func @mlp_kernel(%arg0: i32, %arg1: memref<8x2050xf32, #tpu.memory_space<vmem>>, %arg2: memref<2050x128xbf16, #tpu.memory_space<vmem>>, %arg3: memref<1x128xf32, #tpu.memory_space<vmem>>, %arg4: memref<128x128xbf16, #tpu.memory_space<vmem>>, %arg5: memref<1x128xf32, #tpu.memory_space<vmem>>, %arg6: memref<8x128xf32, #tpu.memory_space<vmem>>) attributes {dimension_semantics = [#tpu.dimension_semantics<parallel>], iteration_bounds = array<i64: 1>, scalar_prefetch = 0 : i64, scratch_operands = 0 : i64, tpu.core_type = #tpu.core_type<tc>, window_params = [{transform_indices = @transform_0, window_bounds = array<i64: 8, 2050>}, {pipeline_mode = #tpu.pipeline_mode<synchronous>, transform_indices = @transform_1, window_bounds = array<i64: 2050, 128>}, {pipeline_mode = #tpu.pipeline_mode<synchronous>, transform_indices = @transform_2, window_bounds = array<i64: 1, 128>}, {pipeline_mode = #tpu.pipeline_mode<synchronous>, transform_indices = @transform_3, window_bounds = array<i64: 128, 128>}, {pipeline_mode = #tpu.pipeline_mode<synchronous>, transform_indices = @transform_4, window_bounds = array<i64: 1, 128>}, {transform_indices = @transform_5, window_bounds = array<i64: 8, 128>}]} {
    %c0 = arith.constant 0 : index
    %c0_0 = arith.constant 0 : index
    %0 = vector.load %arg1[%c0, %c0_0] : memref<8x2050xf32, #tpu.memory_space<vmem>>, vector<8x2050xf32>
    %1 = arith.truncf %0 : vector<8x2050xf32> to vector<8x2050xbf16>
    %c0_1 = arith.constant 0 : index
    %c0_2 = arith.constant 0 : index
    %2 = vector.load %arg2[%c0_1, %c0_2] : memref<2050x128xbf16, #tpu.memory_space<vmem>>, vector<2050x128xbf16>
    %cst = arith.constant dense<0.000000e+00> : vector<8x128xf32>
    %3 = tpu.matmul %1, %2, %cst {dimension_numbers = #tpu.dot_dimension_numbers<[1], [0], [0], [1], [0, 0, 1, 1], [], []>} : vector<8x2050xbf16>, vector<2050x128xbf16>, vector<8x128xf32> -> vector<8x128xf32>
    %c0_3 = arith.constant 0 : index
    %c0_4 = arith.constant 0 : index
    %4 = vector.load %arg3[%c0_3, %c0_4] : memref<1x128xf32, #tpu.memory_space<vmem>>, vector<1x128xf32>
    %5 = vector.broadcast %4 : vector<1x128xf32> to vector<8x128xf32>
    %6 = arith.addf %3, %5 : vector<8x128xf32>
    %cst_5 = arith.constant 0.000000e+00 : f32
    %7 = vector.broadcast %cst_5 : f32 to vector<8x128xf32>
    %8 = arith.maximumf %6, %7 : vector<8x128xf32>
    %9 = arith.truncf %8 : vector<8x128xf32> to vector<8x128xbf16>
    %c0_6 = arith.constant 0 : index
    %c0_7 = arith.constant 0 : index
    %10 = vector.load %arg4[%c0_6, %c0_7] : memref<128x128xbf16, #tpu.memory_space<vmem>>, vector<128x128xbf16>
    %cst_8 = arith.constant dense<0.000000e+00> : vector<8x128xf32>
    %11 = tpu.matmul %9, %10, %cst_8 {dimension_numbers = #tpu.dot_dimension_numbers<[1], [0], [0], [1], [0, 0, 1, 1], [], []>} : vector<8x128xbf16>, vector<128x128xbf16>, vector<8x128xf32> -> vector<8x128xf32>
    %c0_9 = arith.constant 0 : index
    %c0_10 = arith.constant 0 : index
    %12 = vector.load %arg5[%c0_9, %c0_10] : memref<1x128xf32, #tpu.memory_space<vmem>>, vector<1x128xf32>
    %13 = vector.broadcast %12 : vector<1x128xf32> to vector<8x128xf32>
    %14 = arith.addf %11, %13 : vector<8x128xf32>
    %c0_11 = arith.constant 0 : index
    %c0_12 = arith.constant 0 : index
    %15 = vector.load %arg6[%c0_11, %c0_12] : memref<8x128xf32, #tpu.memory_space<vmem>>, vector<8x128xf32>
    tpu.vector_store %arg6[%c0_11, %c0_12], %14 {strides = array<i32>} : memref<8x128xf32, #tpu.memory_space<vmem>>, vector<8x128xf32>,
    return
  }
  func.func @transform_0(%arg0: i32) -> (i32, i32) {
    %c0_i32 = arith.constant 0 : i32
    %c0_i32_0 = arith.constant 0 : i32
    return %arg0, %c0_i32 : i32, i32
  }
  func.func @transform_1(%arg0: i32) -> (i32, i32) {
    %c0_i32 = arith.constant 0 : i32
    %c0_i32_0 = arith.constant 0 : i32
    %c0_i32_1 = arith.constant 0 : i32
    return %c0_i32, %c0_i32_0 : i32, i32
  }
  func.func @transform_2(%arg0: i32) -> (i32, i32) {
    %c0_i32 = arith.constant 0 : i32
    %c0_i32_0 = arith.constant 0 : i32
    %c0_i32_1 = arith.constant 0 : i32
    return %c0_i32, %c0_i32_0 : i32, i32
  }
  func.func @transform_3(%arg0: i32) -> (i32, i32) {
    %c0_i32 = arith.constant 0 : i32
    %c0_i32_0 = arith.constant 0 : i32
    %c0_i32_1 = arith.constant 0 : i32
    return %c0_i32, %c0_i32_0 : i32, i32
  }
  func.func @transform_4(%arg0: i32) -> (i32, i32) {
    %c0_i32 = arith.constant 0 : i32
    %c0_i32_0 = arith.constant 0 : i32
    %c0_i32_1 = arith.constant 0 : i32
    return %c0_i32, %c0_i32_0 : i32, i32
  }
  func.func @transform_5(%arg0: i32) -> (i32, i32) {
    %c0_i32 = arith.constant 0 : i32
    %c0_i32_0 = arith.constant 0 : i32
    return %arg0, %c0_i32 : i32, i32
  }
}

</mosaic_0001>

<llo_original>
// kernel: mlp_forward.1
$region0: #{mlp_forward.1}
  #allocation0 [shape = 'u32[]', space=smem, size = 0x4, offset = 0x4, fixed_abs, tag = 'smem constant byte address 0x4 - core index']
  #allocation1 [shape = 'u32[144,128]{1,0:T(1,128)}', space=vmem, size = 0x12000, scoped, tag = 'internal scratch']
  %s0 = inlined_call_operand.hbm [shape: f32[8,2050], index: 0, kind: input, shape index: {}]
  %s1 = inlined_call_operand.hbm [shape: bf16[2050,128], index: 1, kind: input, shape index: {}]
  %s2 = inlined_call_operand.vmem [shape: f32[1,128], index: 2, kind: input, shape index: {}]
  %s3 = inlined_call_operand.hbm [shape: bf16[128,128], index: 3, kind: input, shape index: {}]
  %s4 = inlined_call_operand.vmem [shape: f32[1,128], index: 4, kind: input, shape index: {}]
  %s5 = inlined_call_operand.vmem [shape: f32[8,128], index: 5, kind: output, shape index: {}]
  %s6 = sld [smem:[#allocation0]]
  $region42: #{mlp_forward.1} parent=0
    _
  %s8 = ssub.s32 1, %s6
  %s9 = scalar_select 0, %s8, %s6
  $region1: #{mlp_forward.1} parent=0
    #allocation2 [shape = 'u8[69632]{0}', space=vmem, size = 0x11000, scoped, tag = 'input window, operand 0, single buffered']
    #allocation3 [shape = 's32[1]{0}', space=sflag, size = 0x4, scoped, tag = 'scoped memory for mlp_forward.1']
    #allocation4 [shape = 'u8[526336]{0}', space=vmem, size = 0x80800, scoped, tag = 'input window, operand 1, single buffered']
    #allocation5 [shape = 's32[1]{0}', space=sflag, size = 0x4, scoped, tag = 'scoped memory for mlp_forward.1']
    #allocation6 [shape = 'u8[32768]{0}', space=vmem, size = 0x8000, scoped, tag = 'input window, operand 3, single buffered']
    %10 = vsyncpa [#allocation3], 0
    %11 = vsyncpa [#allocation5], 0
    // Predicated region
    $region2: #{mlp_forward.1} parent=1 // pred_check
      _
    $region3: #{mlp_forward.1} parent=1 // pred_check_branch
      %13 = sbr.rel (0) target = $region5
    $region4: #{mlp_forward.1} parent=1 // pred_region
      %s15 = ssub.s32 2176, 2176
      %16 = vsyncadd [#allocation3], %s15
      %s18 = sshll.u32 [#allocation2], 4
      %s19 = int_to_ptr.vmem [resolvable:$true] %s18
      %21 = dma.hbm_to_vmem [thread:$0]  %s0, 2176, %s19, [#allocation3]
    $region5: #{mlp_forward.1} parent=1 // pred_fallthru
      _
    // Predicated region
    $region6: #{mlp_forward.1} parent=1 // pred_check
      _
    $region7: #{mlp_forward.1} parent=1 // pred_check_branch
      %23 = sbr.rel (0) target = $region9
    $region8: #{mlp_forward.1} parent=1 // pred_region
      %s25 = ssub.s32 16448, 16448
      %26 = vsyncadd [#allocation5], %s25
      %s27 = sshll.u32 [#allocation4], 4
      %s28 = int_to_ptr.vmem [resolvable:$true] %s27
      %33 = dma.hbm_to_vmem [thread:$0]  %s1, 16448, %s28, [#allocation5], 64, 64, 4
    $region9: #{mlp_forward.1} parent=1 // pred_fallthru
      _
    // Predicated region
    $region10: #{mlp_forward.1} parent=1 // pred_check
      _
    $region11: #{mlp_forward.1} parent=1 // pred_check_branch
      %35 = sbr.rel (0) target = $region13
    $region12: #{mlp_forward.1} parent=1 // pred_region
      _
    $region13: #{mlp_forward.1} parent=1 // pred_fallthru
      _
    // Predicated region
    $region14: #{mlp_forward.1} parent=1 // pred_check
      _
    $region15: #{mlp_forward.1} parent=1 // pred_check_branch
      %37 = sbr.rel (0) target = $region17
    $region16: #{mlp_forward.1} parent=1 // pred_region
      %s39 = ssub.s32 1024, 1024
      %40 = vsyncadd [#allocation5], %s39
      %s41 = sshll.u32 [#allocation6], 4
      %s42 = int_to_ptr.vmem [resolvable:$true] %s41
      %47 = dma.hbm_to_vmem [thread:$0]  %s3, 1024, %s42, [#allocation5], 64, 64, 4
    $region17: #{mlp_forward.1} parent=1 // pred_fallthru
      _
    // Predicated region
    $region18: #{mlp_forward.1} parent=1 // pred_check
      _
    $region19: #{mlp_forward.1} parent=1 // pred_check_branch
      %49 = sbr.rel (0) target = $region21
    $region20: #{mlp_forward.1} parent=1 // pred_region
      _
    $region21: #{mlp_forward.1} parent=1 // pred_fallthru
      _
    // Predicated region
    $region22: #{mlp_forward.1} parent=1 // pred_check
      _
    $region23: #{mlp_forward.1} parent=1 // pred_check_branch
      %51 = sbr.rel (0) target = $region25
    $region24: #{mlp_forward.1} parent=1 // pred_region
      %52 = dma.done [#allocation3], 2176
    $region25: #{mlp_forward.1} parent=1 // pred_fallthru
      _
    // Predicated region
    $region26: #{mlp_forward.1} parent=1 // pred_check
      _
    $region27: #{mlp_forward.1} parent=1 // pred_check_branch
      %54 = sbr.rel (0) target = $region29
    $region28: #{mlp_forward.1} parent=1 // pred_region
      %55 = dma.done [#allocation5], 16448
    $region29: #{mlp_forward.1} parent=1 // pred_fallthru
      _
    // Predicated region
    $region30: #{mlp_forward.1} parent=1 // pred_check
      _
    $region31: #{mlp_forward.1} parent=1 // pred_check_branch
      %57 = sbr.rel (0) target = $region33
    $region32: #{mlp_forward.1} parent=1 // pred_region
      %58 = dma.done [#allocation5], 1024
    $region33: #{mlp_forward.1} parent=1 // pred_fallthru
      _
    %v60 = vld [vmem:[#allocation2] sm:$0xff]
    %v61 = vld [vmem:[#allocation2 + $0x8] sm:$0xff]
    %v62 = vld [vmem:[#allocation2 + $0x10] sm:$0xff]
    %v63 = vld [vmem:[#allocation2 + $0x18] sm:$0xff]
    %v64 = vld [vmem:[#allocation2 + $0x20] sm:$0xff]
    %v65 = vld [vmem:[#allocation2 + $0x28] sm:$0xff]
    %v66 = vld [vmem:[#allocation2 + $0x30] sm:$0xff]
    %v67 = vld [vmem:[#allocation2 + $0x38] sm:$0xff]
    %v68 = vld [vmem:[#allocation2 + $0x40] sm:$0xff]
    %v69 = vld [vmem:[#allocation2 + $0x48] sm:$0xff]
    %v70 = vld [vmem:[#allocation2 + $0x50] sm:$0xff]
    %v71 = vld [vmem:[#allocation2 + $0x58] sm:$0xff]
    %v72 = vld [vmem:[#allocation2 + $0x60] sm:$0xff]
    %v73 = vld [vmem:[#allocation2 + $0x68] sm:$0xff]
    %v74 = vld [vmem:[#allocation2 + $0x70] sm:$0xff]
    %v75 = vld [vmem:[#allocation2 + $0x78] sm:$0xff]
    %v76 = vld [vmem:[#allocation2 + $0x80] sm:$0xff]
    %v77 = vpack.c.bf16 %v60, %v60
    %v78 = vpack.c.bf16 %v61, %v61
    %v79 = vpack.c.bf16 %v62, %v62
    %v80 = vpack.c.bf16 %v63, %v63
    %v81 = vpack.c.bf16 %v64, %v64
    %v82 = vpack.c.bf16 %v65, %v65
    %v83 = vpack.c.bf16 %v66, %v66
    %v84 = vpack.c.bf16 %v67, %v67
    %v85 = vpack.c.bf16 %v68, %v68
    %v86 = vpack.c.bf16 %v69, %v69
    %v87 = vpack.c.bf16 %v70, %v70
    %v88 = vpack.c.bf16 %v71, %v71
    %v89 = vpack.c.bf16 %v72, %v72
    %v90 = vpack.c.bf16 %v73, %v73
    %v91 = vpack.c.bf16 %v74, %v74
    %v92 = vpack.c.bf16 %v75, %v75
    %v93 = vpack.c.bf16 %v76, %v76
    %v94 = vld [vmem:[#allocation4] sm:$0xf]
    %v95 = vld [vmem:[#allocation4 + $0x4] sm:$0xf]
    %v96 = vld [vmem:[#allocation4 + $0x8] sm:$0xf]
    %v97 = vld [vmem:[#allocation4 + $0xc] sm:$0xf]
    %v98 = vld [vmem:[#allocation4 + $0x10] sm:$0xf]
    %v99 = vld [vmem:[#allocation4 + $0x14] sm:$0xf]
    %v100 = vld [vmem:[#allocation4 + $0x18] sm:$0xf]
    %v101 = vld [vmem:[#allocation4 + $0x1c] sm:$0xf]
    %v102 = vld [vmem:[#allocation4 + $0x20] sm:$0xf]
    %v103 = vld [vmem:[#allocation4 + $0x24] sm:$0xf]
    %v104 = vld [vmem:[#allocation4 + $0x28] sm:$0xf]
    %v105 = vld [vmem:[#allocation4 + $0x2c] sm:$0xf]
    %v106 = vld [vmem:[#allocation4 + $0x30] sm:$0xf]
    %v107 = vld [vmem:[#allocation4 + $0x34] sm:$0xf]
    %v108 = vld [vmem:[#allocation4 + $0x38] sm:$0xf]
    %v109 = vld [vmem:[#allocation4 + $0x3c] sm:$0xf]
    %v110 = vld [vmem:[#allocation4 + $0x40] sm:$0xf]
    %v111 = vld [vmem:[#allocation4 + $0x44] sm:$0xf]
    %v112 = vld [vmem:[#allocation4 + $0x48] sm:$0xf]
    %v113 = vld [vmem:[#allocation4 + $0x4c] sm:$0xf]
    %v114 = vld [vmem:[#allocation4 + $0x50] sm:$0xf]
    %v115 = vld [vmem:[#allocation4 + $0x54] sm:$0xf]
    %v116 = vld [vmem:[#allocation4 + $0x58] sm:$0xf]
    %v117 = vld [vmem:[#allocation4 + $0x5c] sm:$0xf]
    %v118 = vld [vmem:[#allocation4 + $0x60] sm:$0xf]
    %v119 = vld [vmem:[#allocation4 + $0x64] sm:$0xf]
    %v120 = vld [vmem:[#allocation4 + $0x68] sm:$0xf]
    %v121 = vld [vmem:[#allocation4 + $0x6c] sm:$0xf]
    %v122 = vld [vmem:[#allocation4 + $0x70] sm:$0xf]
    %v123 = vld [vmem:[#allocation4 + $0x74] sm:$0xf]
    %v124 = vld [vmem:[#allocation4 + $0x78] sm:$0xf]
    %v125 = vld [vmem:[#allocation4 + $0x7c] sm:$0xf]
    %v126 = vld [vmem:[#allocation4 + $0x80] sm:$0xf]
    %v127 = vld [vmem:[#allocation4 + $0x84] sm:$0xf]
    %v128 = vld [vmem:[#allocation4 + $0x88] sm:$0xf]
    %v129 = vld [vmem:[#allocation4 + $0x8c] sm:$0xf]
    %v130 = vld [vmem:[#allocation4 + $0x90] sm:$0xf]
    %v131 = vld [vmem:[#allocation4 + $0x94] sm:$0xf]
    %v132 = vld [vmem:[#allocation4 + $0x98] sm:$0xf]
    %v133 = vld [vmem:[#allocation4 + $0x9c] sm:$0xf]
    %v134 = vld [vmem:[#allocation4 + $0xa0] sm:$0xf]
    %v135 = vld [vmem:[#allocation4 + $0xa4] sm:$0xf]
    %v136 = vld [vmem:[#allocation4 + $0xa8] sm:$0xf]
    %v137 = vld [vmem:[#allocation4 + $0xac] sm:$0xf]
    %v138 = vld [vmem:[#allocation4 + $0xb0] sm:$0xf]
    %v139 = vld [vmem:[#allocation4 + $0xb4] sm:$0xf]
    %v140 = vld [vmem:[#allocation4 + $0xb8] sm:$0xf]
    %v141 = vld [vmem:[#allocation4 + $0xbc] sm:$0xf]
    %v142 = vld [vmem:[#allocation4 + $0xc0] sm:$0xf]
    %v143 = vld [vmem:[#allocation4 + $0xc4] sm:$0xf]
    %v144 = vld [vmem:[#allocation4 + $0xc8] sm:$0xf]
    %v145 = vld [vmem:[#allocation4 + $0xcc] sm:$0xf]
    %v146 = vld [vmem:[#allocation4 + $0xd0] sm:$0xf]
    %v147 = vld [vmem:[#allocation4 + $0xd4] sm:$0xf]
    %v148 = vld [vmem:[#allocation4 + $0xd8] sm:$0xf]
    %v149 = vld [vmem:[#allocation4 + $0xdc] sm:$0xf]
    %v150 = vld [vmem:[#allocation4 + $0xe0] sm:$0xf]
    %v151 = vld [vmem:[#allocation4 + $0xe4] sm:$0xf]
    %v152 = vld [vmem:[#allocation4 + $0xe8] sm:$0xf]
    %v153 = vld [vmem:[#allocation4 + $0xec] sm:$0xf]
    %v154 = vld [vmem:[#allocation4 + $0xf0] sm:$0xf]
    %v155 = vld [vmem:[#allocation4 + $0xf4] sm:$0xf]
    %v156 = vld [vmem:[#allocation4 + $0xf8] sm:$0xf]
    %v157 = vld [vmem:[#allocation4 + $0xfc] sm:$0xf]
    %v158 = vld [vmem:[#allocation4 + $0x100] sm:$0xf]
    %v159 = vld [vmem:[#allocation4 + $0x104] sm:$0xf]
    %v160 = vld [vmem:[#allocation4 + $0x108] sm:$0xf]
    %v161 = vld [vmem:[#allocation4 + $0x10c] sm:$0xf]
    %v162 = vld [vmem:[#allocation4 + $0x110] sm:$0xf]
    %v163 = vld [vmem:[#allocation4 + $0x114] sm:$0xf]
    %v164 = vld [vmem:[#allocation4 + $0x118] sm:$0xf]
    %v165 = vld [vmem:[#allocation4 + $0x11c] sm:$0xf]
    %v166 = vld [vmem:[#allocation4 + $0x120] sm:$0xf]
    %v167 = vld [vmem:[#allocation4 + $0x124] sm:$0xf]
    %v168 = vld [vmem:[#allocation4 + $0x128] sm:$0xf]
    %v169 = vld [vmem:[#allocation4 + $0x12c] sm:$0xf]
    %v170 = vld [vmem:[#allocation4 + $0x130] sm:$0xf]
    %v171 = vld [vmem:[#allocation4 + $0x134] sm:$0xf]
    %v172 = vld [vmem:[#allocation4 + $0x138] sm:$0xf]
    %v173 = vld [vmem:[#allocation4 + $0x13c] sm:$0xf]
    %v174 = vld [vmem:[#allocation4 + $0x140] sm:$0xf]
    %v175 = vld [vmem:[#allocation4 + $0x144] sm:$0xf]
    %v176 = vld [vmem:[#allocation4 + $0x148] sm:$0xf]
    %v177 = vld [vmem:[#allocation4 + $0x14c] sm:$0xf]
    %v178 = vld [vmem:[#allocation4 + $0x150] sm:$0xf]
    %v179 = vld [vmem:[#allocation4 + $0x154] sm:$0xf]
    %v180 = vld [vmem:[#allocation4 + $0x158] sm:$0xf]
    %v181 = vld [vmem:[#allocation4 + $0x15c] sm:$0xf]
    %v182 = vld [vmem:[#allocation4 + $0x160] sm:$0xf]
    %v183 = vld [vmem:[#allocation4 + $0x164] sm:$0xf]
    %v184 = vld [vmem:[#allocation4 + $0x168] sm:$0xf]
    %v185 = vld [vmem:[#allocation4 + $0x16c] sm:$0xf]
    %v186 = vld [vmem:[#allocation4 + $0x170] sm:$0xf]
    %v187 = vld [vmem:[#allocation4 + $0x174] sm:$0xf]
    %v188 = vld [vmem:[#allocation4 + $0x178] sm:$0xf]
    %v189 = vld [vmem:[#allocation4 + $0x17c] sm:$0xf]
    %v190 = vld [vmem:[#allocation4 + $0x180] sm:$0xf]
    %v191 = vld [vmem:[#allocation4 + $0x184] sm:$0xf]
    %v192 = vld [vmem:[#allocation4 + $0x188] sm:$0xf]
    %v193 = vld [vmem:[#allocation4 + $0x18c] sm:$0xf]
    %v194 = vld [vmem:[#allocation4 + $0x190] sm:$0xf]
    %v195 = vld [vmem:[#allocation4 + $0x194] sm:$0xf]
    %v196 = vld [vmem:[#allocation4 + $0x198] sm:$0xf]
    %v197 = vld [vmem:[#allocation4 + $0x19c] sm:$0xf]
    %v198 = vld [vmem:[#allocation4 + $0x1a0] sm:$0xf]
    %v199 = vld [vmem:[#allocation4 + $0x1a4] sm:$0xf]
    %v200 = vld [vmem:[#allocation4 + $0x1a8] sm:$0xf]
    %v201 = vld [vmem:[#allocation4 + $0x1ac] sm:$0xf]
    %v202 = vld [vmem:[#allocation4 + $0x1b0] sm:$0xf]
    %v203 = vld [vmem:[#allocation4 + $0x1b4] sm:$0xf]
    %v204 = vld [vmem:[#allocation4 + $0x1b8] sm:$0xf]
    %v205 = vld [vmem:[#allocation4 + $0x1bc] sm:$0xf]
    %v206 = vld [vmem:[#allocation4 + $0x1c0] sm:$0xf]
    %v207 = vld [vmem:[#allocation4 + $0x1c4] sm:$0xf]
    %v208 = vld [vmem:[#allocation4 + $0x1c8] sm:$0xf]
    %v209 = vld [vmem:[#allocation4 + $0x1cc] sm:$0xf]
    %v210 = vld [vmem:[#allocation4 + $0x1d0] sm:$0xf]
    %v211 = vld [vmem:[#allocation4 + $0x1d4] sm:$0xf]
    %v212 = vld [vmem:[#allocation4 + $0x1d8] sm:$0xf]
    %v213 = vld [vmem:[#allocation4 + $0x1dc] sm:$0xf]
    %v214 = vld [vmem:[#allocation4 + $0x1e0] sm:$0xf]
    %v215 = vld [vmem:[#allocation4 + $0x1e4] sm:$0xf]
    %v216 = vld [vmem:[#allocation4 + $0x1e8] sm:$0xf]
    %v217 = vld [vmem:[#allocation4 + $0x1ec] sm:$0xf]
    %v218 = vld [vmem:[#allocation4 + $0x1f0] sm:$0xf]
    %v219 = vld [vmem:[#allocation4 + $0x1f4] sm:$0xf]
    %v220 = vld [vmem:[#allocation4 + $0x1f8] sm:$0xf]
    %v221 = vld [vmem:[#allocation4 + $0x1fc] sm:$0xf]
    %v222 = vld [vmem:[#allocation4 + $0x200] sm:$0xf]
    %v223 = vld [vmem:[#allocation4 + $0x204] sm:$0xf]
    %v224 = vld [vmem:[#allocation4 + $0x208] sm:$0xf]
    %v225 = vld [vmem:[#allocation4 + $0x20c] sm:$0xf]
    %v226 = vld [vmem:[#allocation4 + $0x210] sm:$0xf]
    %v227 = vld [vmem:[#allocation4 + $0x214] sm:$0xf]
    %v228 = vld [vmem:[#allocation4 + $0x218] sm:$0xf]
    %v229 = vld [vmem:[#allocation4 + $0x21c] sm:$0xf]
    %v230 = vld [vmem:[#allocation4 + $0x220] sm:$0xf]
    %v231 = vld [vmem:[#allocation4 + $0x224] sm:$0xf]
    %v232 = vld [vmem:[#allocation4 + $0x228] sm:$0xf]
    %v233 = vld [vmem:[#allocation4 + $0x22c] sm:$0xf]
    %v234 = vld [vmem:[#allocation4 + $0x230] sm:$0xf]
    %v235 = vld [vmem:[#allocation4 + $0x234] sm:$0xf]
    %v236 = vld [vmem:[#allocation4 + $0x238] sm:$0xf]
    %v237 = vld [vmem:[#allocation4 + $0x23c] sm:$0xf]
    %v238 = vld [vmem:[#allocation4 + $0x240] sm:$0xf]
    %v239 = vld [vmem:[#allocation4 + $0x244] sm:$0xf]
    %v240 = vld [vmem:[#allocation4 + $0x248] sm:$0xf]
    %v241 = vld [vmem:[#allocation4 + $0x24c] sm:$0xf]
    %v242 = vld [vmem:[#allocation4 + $0x250] sm:$0xf]
    %v243 = vld [vmem:[#allocation4 + $0x254] sm:$0xf]
    %v244 = vld [vmem:[#allocation4 + $0x258] sm:$0xf]
    %v245 = vld [vmem:[#allocation4 + $0x25c] sm:$0xf]
    %v246 = vld [vmem:[#allocation4 + $0x260] sm:$0xf]
    %v247 = vld [vmem:[#allocation4 + $0x264] sm:$0xf]
    %v248 = vld [vmem:[#allocation4 + $0x268] sm:$0xf]
    %v249 = vld [vmem:[#allocation4 + $0x26c] sm:$0xf]
    %v250 = vld [vmem:[#allocation4 + $0x270] sm:$0xf]
    %v251 = vld [vmem:[#allocation4 + $0x274] sm:$0xf]
    %v252 = vld [vmem:[#allocation4 + $0x278] sm:$0xf]
    %v253 = vld [vmem:[#allocation4 + $0x27c] sm:$0xf]
    %v254 = vld [vmem:[#allocation4 + $0x280] sm:$0xf]
    %v255 = vld [vmem:[#allocation4 + $0x284] sm:$0xf]
    %v256 = vld [vmem:[#allocation4 + $0x288] sm:$0xf]
    %v257 = vld [vmem:[#allocation4 + $0x28c] sm:$0xf]
    %v258 = vld [vmem:[#allocation4 + $0x290] sm:$0xf]
    %v259 = vld [vmem:[#allocation4 + $0x294] sm:$0xf]
    %v260 = vld [vmem:[#allocation4 + $0x298] sm:$0xf]
    %v261 = vld [vmem:[#allocation4 + $0x29c] sm:$0xf]
    %v262 = vld [vmem:[#allocation4 + $0x2a0] sm:$0xf]
    %v263 = vld [vmem:[#allocation4 + $0x2a4] sm:$0xf]
    %v264 = vld [vmem:[#allocation4 + $0x2a8] sm:$0xf]
    %v265 = vld [vmem:[#allocation4 + $0x2ac] sm:$0xf]
    %v266 = vld [vmem:[#allocation4 + $0x2b0] sm:$0xf]
    %v267 = vld [vmem:[#allocation4 + $0x2b4] sm:$0xf]
    %v268 = vld [vmem:[#allocation4 + $0x2b8] sm:$0xf]
    %v269 = vld [vmem:[#allocation4 + $0x2bc] sm:$0xf]
    %v270 = vld [vmem:[#allocation4 + $0x2c0] sm:$0xf]
    %v271 = vld [vmem:[#allocation4 + $0x2c4] sm:$0xf]
    %v272 = vld [vmem:[#allocation4 + $0x2c8] sm:$0xf]
    %v273 = vld [vmem:[#allocation4 + $0x2cc] sm:$0xf]
    %v274 = vld [vmem:[#allocation4 + $0x2d0] sm:$0xf]
    %v275 = vld [vmem:[#allocation4 + $0x2d4] sm:$0xf]
    %v276 = vld [vmem:[#allocation4 + $0x2d8] sm:$0xf]
    %v277 = vld [vmem:[#allocation4 + $0x2dc] sm:$0xf]
    %v278 = vld [vmem:[#allocation4 + $0x2e0] sm:$0xf]
    %v279 = vld [vmem:[#allocation4 + $0x2e4] sm:$0xf]
    %v280 = vld [vmem:[#allocation4 + $0x2e8] sm:$0xf]
    %v281 = vld [vmem:[#allocation4 + $0x2ec] sm:$0xf]
    %v282 = vld [vmem:[#allocation4 + $0x2f0] sm:$0xf]
    %v283 = vld [vmem:[#allocation4 + $0x2f4] sm:$0xf]
    %v284 = vld [vmem:[#allocation4 + $0x2f8] sm:$0xf]
    %v285 = vld [vmem:[#allocation4 + $0x2fc] sm:$0xf]
    %v286 = vld [vmem:[#allocation4 + $0x300] sm:$0xf]
    %v287 = vld [vmem:[#allocation4 + $0x304] sm:$0xf]
    %v288 = vld [vmem:[#allocation4 + $0x308] sm:$0xf]
    %v289 = vld [vmem:[#allocation4 + $0x30c] sm:$0xf]
    %v290 = vld [vmem:[#allocation4 + $0x310] sm:$0xf]
    %v291 = vld [vmem:[#allocation4 + $0x314] sm:$0xf]
    %v292 = vld [vmem:[#allocation4 + $0x318] sm:$0xf]
    %v293 = vld [vmem:[#allocation4 + $0x31c] sm:$0xf]
    %v294 = vld [vmem:[#allocation4 + $0x320] sm:$0xf]
    %v295 = vld [vmem:[#allocation4 + $0x324] sm:$0xf]
    %v296 = vld [vmem:[#allocation4 + $0x328] sm:$0xf]
    %v297 = vld [vmem:[#allocation4 + $0x32c] sm:$0xf]
    %v298 = vld [vmem:[#allocation4 + $0x330] sm:$0xf]
    %v299 = vld [vmem:[#allocation4 + $0x334] sm:$0xf]
    %v300 = vld [vmem:[#allocation4 + $0x338] sm:$0xf]
    %v301 = vld [vmem:[#allocation4 + $0x33c] sm:$0xf]
    %v302 = vld [vmem:[#allocation4 + $0x340] sm:$0xf]
    %v303 = vld [vmem:[#allocation4 + $0x344] sm:$0xf]
    %v304 = vld [vmem:[#allocation4 + $0x348] sm:$0xf]
    %v305 = vld [vmem:[#allocation4 + $0x34c] sm:$0xf]
    %v306 = vld [vmem:[#allocation4 + $0x350] sm:$0xf]
    %v307 = vld [vmem:[#allocation4 + $0x354] sm:$0xf]
    %v308 = vld [vmem:[#allocation4 + $0x358] sm:$0xf]
    %v309 = vld [vmem:[#allocation4 + $0x35c] sm:$0xf]
    %v310 = vld [vmem:[#allocation4 + $0x360] sm:$0xf]
    %v311 = vld [vmem:[#allocation4 + $0x364] sm:$0xf]
    %v312 = vld [vmem:[#allocation4 + $0x368] sm:$0xf]
    %v313 = vld [vmem:[#allocation4 + $0x36c] sm:$0xf]
    %v314 = vld [vmem:[#allocation4 + $0x370] sm:$0xf]
    %v315 = vld [vmem:[#allocation4 + $0x374] sm:$0xf]
    %v316 = vld [vmem:[#allocation4 + $0x378] sm:$0xf]
    %v317 = vld [vmem:[#allocation4 + $0x37c] sm:$0xf]
    %v318 = vld [vmem:[#allocation4 + $0x380] sm:$0xf]
    %v319 = vld [vmem:[#allocation4 + $0x384] sm:$0xf]
    %v320 = vld [vmem:[#allocation4 + $0x388] sm:$0xf]
    %v321 = vld [vmem:[#allocation4 + $0x38c] sm:$0xf]
    %v322 = vld [vmem:[#allocation4 + $0x390] sm:$0xf]
    %v323 = vld [vmem:[#allocation4 + $0x394] sm:$0xf]
    %v324 = vld [vmem:[#allocation4 + $0x398] sm:$0xf]
    %v325 = vld [vmem:[#allocation4 + $0x39c] sm:$0xf]
    %v326 = vld [vmem:[#allocation4 + $0x3a0] sm:$0xf]
    %v327 = vld [vmem:[#allocation4 + $0x3a4] sm:$0xf]
    %v328 = vld [vmem:[#allocation4 + $0x3a8] sm:$0xf]
    %v329 = vld [vmem:[#allocation4 + $0x3ac] sm:$0xf]
    %v330 = vld [vmem:[#allocation4 + $0x3b0] sm:$0xf]
    %v331 = vld [vmem:[#allocation4 + $0x3b4] sm:$0xf]
    %v332 = vld [vmem:[#allocation4 + $0x3b8] sm:$0xf]
    %v333 = vld [vmem:[#allocation4 + $0x3bc] sm:$0xf]
    %v334 = vld [vmem:[#allocation4 + $0x3c0] sm:$0xf]
    %v335 = vld [vmem:[#allocation4 + $0x3c4] sm:$0xf]
    %v336 = vld [vmem:[#allocation4 + $0x3c8] sm:$0xf]
    %v337 = vld [vmem:[#allocation4 + $0x3cc] sm:$0xf]
    %v338 = vld [vmem:[#allocation4 + $0x3d0] sm:$0xf]
    %v339 = vld [vmem:[#allocation4 + $0x3d4] sm:$0xf]
    %v340 = vld [vmem:[#allocation4 + $0x3d8] sm:$0xf]
    %v341 = vld [vmem:[#allocation4 + $0x3dc] sm:$0xf]
    %v342 = vld [vmem:[#allocation4 + $0x3e0] sm:$0xf]
    %v343 = vld [vmem:[#allocation4 + $0x3e4] sm:$0xf]
    %v344 = vld [vmem:[#allocation4 + $0x3e8] sm:$0xf]
    %v345 = vld [vmem:[#allocation4 + $0x3ec] sm:$0xf]
    %v346 = vld [vmem:[#allocation4 + $0x3f0] sm:$0xf]
    %v347 = vld [vmem:[#allocation4 + $0x3f4] sm:$0xf]
    %v348 = vld [vmem:[#allocation4 + $0x3f8] sm:$0xf]
    %v349 = vld [vmem:[#allocation4 + $0x3fc] sm:$0xf]
    %v350 = vld [vmem:[#allocation4 + $0x400] sm:$0x1]
    %v351 = vld [vmem:[%s2] sm:$0x1]
    %v353 = vlaneseq
    %v354 = vshrl.u32 %v353, 7
    %v355 = vsub.s32 0, %v354
    %v356 = vrot.slane %v351, %v355
    %v615 = vunpack.c.l.b16 %v94
    %v616 = vunpack.c.l.b16 %v95
    %v617 = vunpack.c.l.b16 %v96
    %v618 = vunpack.c.l.b16 %v97
    %v619 = vunpack.c.l.b16 %v98
    %v620 = vunpack.c.l.b16 %v99
    %v621 = vunpack.c.l.b16 %v100
    %v622 = vunpack.c.l.b16 %v101
    %v623 = vunpack.c.l.b16 %v102
    %v624 = vunpack.c.l.b16 %v103
    %v625 = vunpack.c.l.b16 %v104
    %v626 = vunpack.c.l.b16 %v105
    %v627 = vunpack.c.l.b16 %v106
    %v628 = vunpack.c.l.b16 %v107
    %v629 = vunpack.c.l.b16 %v108
    %v630 = vunpack.c.l.b16 %v109
    %v631 = vunpack.c.l.b16 %v110
    %v632 = vunpack.c.l.b16 %v111
    %v633 = vunpack.c.l.b16 %v112
    %v634 = vunpack.c.l.b16 %v113
    %v635 = vunpack.c.l.b16 %v114
    %v636 = vunpack.c.l.b16 %v115
    %v637 = vunpack.c.l.b16 %v116
    %v638 = vunpack.c.l.b16 %v117
    %v639 = vunpack.c.l.b16 %v118
    %v640 = vunpack.c.l.b16 %v119
    %v641 = vunpack.c.l.b16 %v120
    %v642 = vunpack.c.l.b16 %v121
    %v643 = vunpack.c.l.b16 %v122
    %v644 = vunpack.c.l.b16 %v123
    %v645 = vunpack.c.l.b16 %v124
    %v646 = vunpack.c.l.b16 %v125
    %v647 = vunpack.c.l.b16 %v126
    %v648 = vunpack.c.l.b16 %v127
    %v649 = vunpack.c.l.b16 %v128
    %v650 = vunpack.c.l.b16 %v129
    %v651 = vunpack.c.l.b16 %v130
    %v652 = vunpack.c.l.b16 %v131
    %v653 = vunpack.c.l.b16 %v132
    %v654 = vunpack.c.l.b16 %v133
    %v655 = vunpack.c.l.b16 %v134
    %v656 = vunpack.c.l.b16 %v135
    %v657 = vunpack.c.l.b16 %v136
    %v658 = vunpack.c.l.b16 %v137
    %v659 = vunpack.c.l.b16 %v138
    %v660 = vunpack.c.l.b16 %v139
    %v661 = vunpack.c.l.b16 %v140
    %v662 = vunpack.c.l.b16 %v141
    %v663 = vunpack.c.l.b16 %v142
    %v664 = vunpack.c.l.b16 %v143
    %v665 = vunpack.c.l.b16 %v144
    %v666 = vunpack.c.l.b16 %v145
    %v667 = vunpack.c.l.b16 %v146
    %v668 = vunpack.c.l.b16 %v147
    %v669 = vunpack.c.l.b16 %v148
    %v670 = vunpack.c.l.b16 %v149
    %v671 = vunpack.c.l.b16 %v150
    %v672 = vunpack.c.l.b16 %v151
    %v673 = vunpack.c.l.b16 %v152
    %v674 = vunpack.c.l.b16 %v153
    %v675 = vunpack.c.l.b16 %v154
    %v676 = vunpack.c.l.b16 %v155
    %v677 = vunpack.c.l.b16 %v156
    %v678 = vunpack.c.l.b16 %v157
    %v679 = vunpack.c.l.b16 %v158
    %v680 = vunpack.c.l.b16 %v159
    %v681 = vunpack.c.l.b16 %v160
    %v682 = vunpack.c.l.b16 %v161
    %v683 = vunpack.c.l.b16 %v162
    %v684 = vunpack.c.l.b16 %v163
    %v685 = vunpack.c.l.b16 %v164
    %v686 = vunpack.c.l.b16 %v165
    %v687 = vunpack.c.l.b16 %v166
    %v688 = vunpack.c.l.b16 %v167
    %v689 = vunpack.c.l.b16 %v168
    %v690 = vunpack.c.l.b16 %v169
    %v691 = vunpack.c.l.b16 %v170
    %v692 = vunpack.c.l.b16 %v171
    %v693 = vunpack.c.l.b16 %v172
    %v694 = vunpack.c.l.b16 %v173
    %v695 = vunpack.c.l.b16 %v174
    %v696 = vunpack.c.l.b16 %v175
    %v697 = vunpack.c.l.b16 %v176
    %v698 = vunpack.c.l.b16 %v177
    %v699 = vunpack.c.l.b16 %v178
    %v700 = vunpack.c.l.b16 %v179
    %v701 = vunpack.c.l.b16 %v180
    %v702 = vunpack.c.l.b16 %v181
    %v703 = vunpack.c.l.b16 %v182
    %v704 = vunpack.c.l.b16 %v183
    %v705 = vunpack.c.l.b16 %v184
    %v706 = vunpack.c.l.b16 %v185
    %v707 = vunpack.c.l.b16 %v186
    %v708 = vunpack.c.l.b16 %v187
    %v709 = vunpack.c.l.b16 %v188
    %v710 = vunpack.c.l.b16 %v189
    %v711 = vunpack.c.l.b16 %v190
    %v712 = vunpack.c.l.b16 %v191
    %v713 = vunpack.c.l.b16 %v192
    %v714 = vunpack.c.l.b16 %v193
    %v715 = vunpack.c.l.b16 %v194
    %v716 = vunpack.c.l.b16 %v195
    %v717 = vunpack.c.l.b16 %v196
    %v718 = vunpack.c.l.b16 %v197
    %v719 = vunpack.c.l.b16 %v198
    %v720 = vunpack.c.l.b16 %v199
    %v721 = vunpack.c.l.b16 %v200
    %v722 = vunpack.c.l.b16 %v201
    %v723 = vunpack.c.l.b16 %v202
    %v724 = vunpack.c.l.b16 %v203
    %v725 = vunpack.c.l.b16 %v204
    %v726 = vunpack.c.l.b16 %v205
    %v727 = vunpack.c.l.b16 %v206
    %v728 = vunpack.c.l.b16 %v207
    %v729 = vunpack.c.l.b16 %v208
    %v730 = vunpack.c.l.b16 %v209
    %v731 = vunpack.c.l.b16 %v210
    %v732 = vunpack.c.l.b16 %v211
    %v733 = vunpack.c.l.b16 %v212
    %v734 = vunpack.c.l.b16 %v213
    %v735 = vunpack.c.l.b16 %v214
    %v736 = vunpack.c.l.b16 %v215
    %v737 = vunpack.c.l.b16 %v216
    %v738 = vunpack.c.l.b16 %v217
    %v739 = vunpack.c.l.b16 %v218
    %v740 = vunpack.c.l.b16 %v219
    %v741 = vunpack.c.l.b16 %v220
    %v742 = vunpack.c.l.b16 %v221
    %v743 = vunpack.c.l.b16 %v222
    %v744 = vunpack.c.l.b16 %v223
    %v745 = vunpack.c.l.b16 %v224
    %v746 = vunpack.c.l.b16 %v225
    %v747 = vunpack.c.l.b16 %v226
    %v748 = vunpack.c.l.b16 %v227
    %v749 = vunpack.c.l.b16 %v228
    %v750 = vunpack.c.l.b16 %v229
    %v751 = vunpack.c.l.b16 %v230
    %v752 = vunpack.c.l.b16 %v231
    %v753 = vunpack.c.l.b16 %v232
    %v754 = vunpack.c.l.b16 %v233
    %v755 = vunpack.c.l.b16 %v234
    %v756 = vunpack.c.l.b16 %v235
    %v757 = vunpack.c.l.b16 %v236
    %v758 = vunpack.c.l.b16 %v237
    %v759 = vunpack.c.l.b16 %v238
    %v760 = vunpack.c.l.b16 %v239
    %v761 = vunpack.c.l.b16 %v240
    %v762 = vunpack.c.l.b16 %v241
    %v763 = vunpack.c.l.b16 %v242
    %v764 = vunpack.c.l.b16 %v243
    %v765 = vunpack.c.l.b16 %v244
    %v766 = vunpack.c.l.b16 %v245
    %v767 = vunpack.c.l.b16 %v246
    %v768 = vunpack.c.l.b16 %v247
    %v769 = vunpack.c.l.b16 %v248
    %v770 = vunpack.c.l.b16 %v249
    %v771 = vunpack.c.l.b16 %v250
    %v772 = vunpack.c.l.b16 %v251
    %v773 = vunpack.c.l.b16 %v252
    %v774 = vunpack.c.l.b16 %v253
    %v775 = vunpack.c.l.b16 %v254
    %v776 = vunpack.c.l.b16 %v255
    %v777 = vunpack.c.l.b16 %v256
    %v778 = vunpack.c.l.b16 %v257
    %v779 = vunpack.c.l.b16 %v258
    %v780 = vunpack.c.l.b16 %v259
    %v781 = vunpack.c.l.b16 %v260
    %v782 = vunpack.c.l.b16 %v261
    %v783 = vunpack.c.l.b16 %v262
    %v784 = vunpack.c.l.b16 %v263
    %v785 = vunpack.c.l.b16 %v264
    %v786 = vunpack.c.l.b16 %v265
    %v787 = vunpack.c.l.b16 %v266
    %v788 = vunpack.c.l.b16 %v267
    %v789 = vunpack.c.l.b16 %v268
    %v790 = vunpack.c.l.b16 %v269
    %v791 = vunpack.c.l.b16 %v270
    %v792 = vunpack.c.l.b16 %v271
    %v793 = vunpack.c.l.b16 %v272
    %v794 = vunpack.c.l.b16 %v273
    %v795 = vunpack.c.l.b16 %v274
    %v796 = vunpack.c.l.b16 %v275
    %v797 = vunpack.c.l.b16 %v276
    %v798 = vunpack.c.l.b16 %v277
    %v799 = vunpack.c.l.b16 %v278
    %v800 = vunpack.c.l.b16 %v279
    %v801 = vunpack.c.l.b16 %v280
    %v802 = vunpack.c.l.b16 %v281
    %v803 = vunpack.c.l.b16 %v282
    %v804 = vunpack.c.l.b16 %v283
    %v805 = vunpack.c.l.b16 %v284
    %v806 = vunpack.c.l.b16 %v285
    %v807 = vunpack.c.l.b16 %v286
    %v808 = vunpack.c.l.b16 %v287
    %v809 = vunpack.c.l.b16 %v288
    %v810 = vunpack.c.l.b16 %v289
    %v811 = vunpack.c.l.b16 %v290
    %v812 = vunpack.c.l.b16 %v291
    %v813 = vunpack.c.l.b16 %v292
    %v814 = vunpack.c.l.b16 %v293
    %v815 = vunpack.c.l.b16 %v294
    %v816 = vunpack.c.l.b16 %v295
    %v817 = vunpack.c.l.b16 %v296
    %v818 = vunpack.c.l.b16 %v297
    %v819 = vunpack.c.l.b16 %v298
    %v820 = vunpack.c.l.b16 %v299
    %v821 = vunpack.c.l.b16 %v300
    %v822 = vunpack.c.l.b16 %v301
    %v823 = vunpack.c.l.b16 %v302
    %v824 = vunpack.c.l.b16 %v303
    %v825 = vunpack.c.l.b16 %v304
    %v826 = vunpack.c.l.b16 %v305
    %v827 = vunpack.c.l.b16 %v306
    %v828 = vunpack.c.l.b16 %v307
    %v829 = vunpack.c.l.b16 %v308
    %v830 = vunpack.c.l.b16 %v309
    %v831 = vunpack.c.l.b16 %v310
    %v832 = vunpack.c.l.b16 %v311
    %v833 = vunpack.c.l.b16 %v312
    %v834 = vunpack.c.l.b16 %v313
    %v835 = vunpack.c.l.b16 %v314
    %v836 = vunpack.c.l.b16 %v315
    %v837 = vunpack.c.l.b16 %v316
    %v838 = vunpack.c.l.b16 %v317
    %v839 = vunpack.c.l.b16 %v318
    %v840 = vunpack.c.l.b16 %v319
    %v841 = vunpack.c.l.b16 %v320
    %v842 = vunpack.c.l.b16 %v321
    %v843 = vunpack.c.l.b16 %v322
    %v844 = vunpack.c.l.b16 %v323
    %v845 = vunpack.c.l.b16 %v324
    %v846 = vunpack.c.l.b16 %v325
    %v847 = vunpack.c.l.b16 %v326
    %v848 = vunpack.c.l.b16 %v327
    %v849 = vunpack.c.l.b16 %v328
    %v850 = vunpack.c.l.b16 %v329
    %v851 = vunpack.c.l.b16 %v330
    %v852 = vunpack.c.l.b16 %v331
    %v853 = vunpack.c.l.b16 %v332
    %v854 = vunpack.c.l.b16 %v333
    %v855 = vunpack.c.l.b16 %v334
    %v856 = vunpack.c.l.b16 %v335
    %v857 = vunpack.c.l.b16 %v336
    %v858 = vunpack.c.l.b16 %v337
    %v859 = vunpack.c.l.b16 %v338
    %v860 = vunpack.c.l.b16 %v339
    %v861 = vunpack.c.l.b16 %v340
    %v862 = vunpack.c.l.b16 %v341
    %v863 = vunpack.c.l.b16 %v342
    %v864 = vunpack.c.l.b16 %v343
    %v865 = vunpack.c.l.b16 %v344
    %v866 = vunpack.c.l.b16 %v345
    %v867 = vunpack.c.l.b16 %v346
    %v868 = vunpack.c.l.b16 %v347
    %v869 = vunpack.c.l.b16 %v348
    %v870 = vunpack.c.l.b16 %v349
    %v871 = vunpack.c.l.b16 %v350
    %v872 = vpack.c.b16 %v616, %v615
    %v873 = vpack.c.b16 %v618, %v617
    %v874 = vpack.c.b16 %v620, %v619
    %v875 = vpack.c.b16 %v622, %v621
    %v876 = vpack.c.b16 %v624, %v623
    %v877 = vpack.c.b16 %v626, %v625
    %v878 = vpack.c.b16 %v628, %v627
    %v879 = vpack.c.b16 %v630, %v629
    %v880 = vpack.c.b16 %v632, %v631
    %v881 = vpack.c.b16 %v634, %v633
    %v882 = vpack.c.b16 %v636, %v635
    %v883 = vpack.c.b16 %v638, %v637
    %v884 = vpack.c.b16 %v640, %v639
    %v885 = vpack.c.b16 %v642, %v641
    %v886 = vpack.c.b16 %v644, %v643
    %v887 = vpack.c.b16 %v646, %v645
    %v888 = vpack.c.b16 %v648, %v647
    %v889 = vpack.c.b16 %v650, %v649
    %v890 = vpack.c.b16 %v652, %v651
    %v891 = vpack.c.b16 %v654, %v653
    %v892 = vpack.c.b16 %v656, %v655
    %v893 = vpack.c.b16 %v658, %v657
    %v894 = vpack.c.b16 %v660, %v659
    %v895 = vpack.c.b16 %v662, %v661
    %v896 = vpack.c.b16 %v664, %v663
    %v897 = vpack.c.b16 %v666, %v665
    %v898 = vpack.c.b16 %v668, %v667
    %v899 = vpack.c.b16 %v670, %v669
    %v900 = vpack.c.b16 %v672, %v671
    %v901 = vpack.c.b16 %v674, %v673
    %v902 = vpack.c.b16 %v676, %v675
    %v903 = vpack.c.b16 %v678, %v677
    %v904 = vpack.c.b16 %v680, %v679
    %v905 = vpack.c.b16 %v682, %v681
    %v906 = vpack.c.b16 %v684, %v683
    %v907 = vpack.c.b16 %v686, %v685
    %v908 = vpack.c.b16 %v688, %v687
    %v909 = vpack.c.b16 %v690, %v689
    %v910 = vpack.c.b16 %v692, %v691
    %v911 = vpack.c.b16 %v694, %v693
    %v912 = vpack.c.b16 %v696, %v695
    %v913 = vpack.c.b16 %v698, %v697
    %v914 = vpack.c.b16 %v700, %v699
    %v915 = vpack.c.b16 %v702, %v701
    %v916 = vpack.c.b16 %v704, %v703
    %v917 = vpack.c.b16 %v706, %v705
    %v918 = vpack.c.b16 %v708, %v707
    %v919 = vpack.c.b16 %v710, %v709
    %v920 = vpack.c.b16 %v712, %v711
    %v921 = vpack.c.b16 %v714, %v713
    %v922 = vpack.c.b16 %v716, %v715
    %v923 = vpack.c.b16 %v718, %v717
    %v924 = vpack.c.b16 %v720, %v719
    %v925 = vpack.c.b16 %v722, %v721
    %v926 = vpack.c.b16 %v724, %v723
    %v927 = vpack.c.b16 %v726, %v725
    %v928 = vpack.c.b16 %v728, %v727
    %v929 = vpack.c.b16 %v730, %v729
    %v930 = vpack.c.b16 %v732, %v731
    %v931 = vpack.c.b16 %v734, %v733
    %v932 = vpack.c.b16 %v736, %v735
    %v933 = vpack.c.b16 %v738, %v737
    %v934 = vpack.c.b16 %v740, %v739
    %v935 = vpack.c.b16 %v742, %v741
    %v936 = vpack.c.b16 %v744, %v743
    %v937 = vpack.c.b16 %v746, %v745
    %v938 = vpack.c.b16 %v748, %v747
    %v939 = vpack.c.b16 %v750, %v749
    %v940 = vpack.c.b16 %v752, %v751
    %v941 = vpack.c.b16 %v754, %v753
    %v942 = vpack.c.b16 %v756, %v755
    %v943 = vpack.c.b16 %v758, %v757
    %v944 = vpack.c.b16 %v760, %v759
    %v945 = vpack.c.b16 %v762, %v761
    %v946 = vpack.c.b16 %v764, %v763
    %v947 = vpack.c.b16 %v766, %v765
    %v948 = vpack.c.b16 %v768, %v767
    %v949 = vpack.c.b16 %v770, %v769
    %v950 = vpack.c.b16 %v772, %v771
    %v951 = vpack.c.b16 %v774, %v773
    %v952 = vpack.c.b16 %v776, %v775
    %v953 = vpack.c.b16 %v778, %v777
    %v954 = vpack.c.b16 %v780, %v779
    %v955 = vpack.c.b16 %v782, %v781
    %v956 = vpack.c.b16 %v784, %v783
    %v957 = vpack.c.b16 %v786, %v785
    %v958 = vpack.c.b16 %v788, %v787
    %v959 = vpack.c.b16 %v790, %v789
    %v960 = vpack.c.b16 %v792, %v791
    %v961 = vpack.c.b16 %v794, %v793
    %v962 = vpack.c.b16 %v796, %v795
    %v963 = vpack.c.b16 %v798, %v797
    %v964 = vpack.c.b16 %v800, %v799
    %v965 = vpack.c.b16 %v802, %v801
    %v966 = vpack.c.b16 %v804, %v803
    %v967 = vpack.c.b16 %v806, %v805
    %v968 = vpack.c.b16 %v808, %v807
    %v969 = vpack.c.b16 %v810, %v809
    %v970 = vpack.c.b16 %v812, %v811
    %v971 = vpack.c.b16 %v814, %v813
    %v972 = vpack.c.b16 %v816, %v815
    %v973 = vpack.c.b16 %v818, %v817
    %v974 = vpack.c.b16 %v820, %v819
    %v975 = vpack.c.b16 %v822, %v821
    %v976 = vpack.c.b16 %v824, %v823
    %v977 = vpack.c.b16 %v826, %v825
    %v978 = vpack.c.b16 %v828, %v827
    %v979 = vpack.c.b16 %v830, %v829
    %v980 = vpack.c.b16 %v832, %v831
    %v981 = vpack.c.b16 %v834, %v833
    %v982 = vpack.c.b16 %v836, %v835
    %v983 = vpack.c.b16 %v838, %v837
    %v984 = vpack.c.b16 %v840, %v839
    %v985 = vpack.c.b16 %v842, %v841
    %v986 = vpack.c.b16 %v844, %v843
    %v987 = vpack.c.b16 %v846, %v845
    %v988 = vpack.c.b16 %v848, %v847
    %v989 = vpack.c.b16 %v850, %v849
    %v990 = vpack.c.b16 %v852, %v851
    %v991 = vpack.c.b16 %v854, %v853
    %v992 = vpack.c.b16 %v856, %v855
    %v993 = vpack.c.b16 %v858, %v857
    %v994 = vpack.c.b16 %v860, %v859
    %v995 = vpack.c.b16 %v862, %v861
    %v996 = vpack.c.b16 %v864, %v863
    %v997 = vpack.c.b16 %v866, %v865
    %v998 = vpack.c.b16 %v868, %v867
    %v999 = vpack.c.b16 %v870, %v869
    %v1000 = vpack.c.b16 %v871, %v871
    %vm1129 = vcmask 15360
    %v1131 = vsel %vm1129, %v93, 0
    %vm1133 = vcmask 1040384
    %v1135 = vsel %vm1133, %v1000, 0
    %1137 = vmatprep.subr.bf16.mxu0 0
    %1138 = vmatpush1.bf16.msra.mxu0 %v879
    %1139 = vmatprep.subr.bf16.mxu0 0
    %1140 = vmatpush1.bf16.msra.mxu0 %v878
    %1141 = vmatprep.subr.bf16.mxu0 0
    %1142 = vmatpush1.bf16.msra.mxu0 %v877
    %1143 = vmatprep.subr.bf16.mxu0 0
    %1144 = vmatpush1.bf16.msra.mxu0 %v876
    %1145 = vmatprep.subr.bf16.mxu0 0
    %1146 = vmatpush1.bf16.msra.mxu0 %v875
    %1147 = vmatprep.subr.bf16.mxu0 0
    %1148 = vmatpush1.bf16.msra.mxu0 %v874
    %1149 = vmatprep.subr.bf16.mxu0 0
    %1150 = vmatpush1.bf16.msra.mxu0 %v873
    %1151 = vmatprep.subr.bf16.mxu0 0
    %1152 = vmatpush1.bf16.msra.mxu0 %v872
    %1153 = vmatprep.subr.bf16.mxu0 0
    %1154 = vmatpush2.bf16.msra.mxu0 %v887
    %1155 = vmatprep.subr.bf16.mxu0 0
    %1156 = vmatpush2.bf16.msra.mxu0 %v886
    %1157 = vmatprep.subr.bf16.mxu0 0
    %1158 = vmatpush2.bf16.msra.mxu0 %v885
    %1159 = vmatprep.subr.bf16.mxu0 0
    %1160 = vmatpush2.bf16.msra.mxu0 %v884
    %1161 = vmatprep.subr.bf16.mxu0 0
    %1162 = vmatpush2.bf16.msra.mxu0 %v883
    %1163 = vmatprep.subr.bf16.mxu0 0
    %1164 = vmatpush2.bf16.msra.mxu0 %v882
    %1165 = vmatprep.subr.bf16.mxu0 0
    %1166 = vmatpush2.bf16.msra.mxu0 %v881
    %1167 = vmatprep.subr.bf16.mxu0 0
    %1168 = vmatpush2.bf16.msra.mxu0 %v880
    %1169 = vmatprep.mubr.bf16.mxu0 %v78
    %1170 = vmatmul.mubr.bf16.gmra.mxu0 %v77
    %v1171 = vpop.f32.mrf.mxu0
    %v1172 = vadd.f32 %v356, %v1171
    %v1173 = vpop.f32.mrf.mxu0
    %v1174 = vpop.f32.mrf.mxu0
    %v1175 = vpop.f32.mrf.mxu0
    %1176 = vdwg.mxu0
    %1177 = vmatprep.subr.bf16.mxu0 0
    %1178 = vmatpush1.bf16.msra.mxu0 %v895
    %1179 = vmatprep.subr.bf16.mxu0 0
    %1180 = vmatpush1.bf16.msra.mxu0 %v894
    %1181 = vmatprep.subr.bf16.mxu0 0
    %1182 = vmatpush1.bf16.msra.mxu0 %v893
    %1183 = vmatprep.subr.bf16.mxu0 0
    %1184 = vmatpush1.bf16.msra.mxu0 %v892
    %1185 = vmatprep.subr.bf16.mxu0 0
    %1186 = vmatpush1.bf16.msra.mxu0 %v891
    %1187 = vmatprep.subr.bf16.mxu0 0
    %1188 = vmatpush1.bf16.msra.mxu0 %v890
    %1189 = vmatprep.subr.bf16.mxu0 0
    %1190 = vmatpush1.bf16.msra.mxu0 %v889
    %1191 = vmatprep.subr.bf16.mxu0 0
    %1192 = vmatpush1.bf16.msra.mxu0 %v888
    %1193 = vmatprep.subr.bf16.mxu0 0
    %1194 = vmatpush2.bf16.msra.mxu0 %v903
    %1195 = vmatprep.subr.bf16.mxu0 0
    %1196 = vmatpush2.bf16.msra.mxu0 %v902
    %1197 = vmatprep.subr.bf16.mxu0 0
    %1198 = vmatpush2.bf16.msra.mxu0 %v901
    %1199 = vmatprep.subr.bf16.mxu0 0
    %1200 = vmatpush2.bf16.msra.mxu0 %v900
    %1201 = vmatprep.subr.bf16.mxu0 0
    %1202 = vmatpush2.bf16.msra.mxu0 %v899
    %1203 = vmatprep.subr.bf16.mxu0 0
    %1204 = vmatpush2.bf16.msra.mxu0 %v898
    %1205 = vmatprep.subr.bf16.mxu0 0
    %1206 = vmatpush2.bf16.msra.mxu0 %v897
    %1207 = vmatprep.subr.bf16.mxu0 0
    %1208 = vmatpush2.bf16.msra.mxu0 %v896
    %1209 = vmatprep.mubr.bf16.mxu0 %v80
    %1210 = vmatmul.mubr.bf16.gmra.mxu0 %v79
    %v1211 = vpop.f32.mrf.mxu0
    %v1212 = vadd.f32 %v1172, %v1211
    %v1213 = vpop.f32.mrf.mxu0
    %v1214 = vpop.f32.mrf.mxu0
    %v1215 = vpop.f32.mrf.mxu0
    %1216 = vdwg.mxu0
    %1217 = vmatprep.subr.bf16.mxu0 0
    %1218 = vmatpush1.bf16.msra.mxu0 %v911
    %1219 = vmatprep.subr.bf16.mxu0 0
    %1220 = vmatpush1.bf16.msra.mxu0 %v910
    %1221 = vmatprep.subr.bf16.mxu0 0
    %1222 = vmatpush1.bf16.msra.mxu0 %v909
    %1223 = vmatprep.subr.bf16.mxu0 0
    %1224 = vmatpush1.bf16.msra.mxu0 %v908
    %1225 = vmatprep.subr.bf16.mxu0 0
    %1226 = vmatpush1.bf16.msra.mxu0 %v907
    %1227 = vmatprep.subr.bf16.mxu0 0
    %1228 = vmatpush1.bf16.msra.mxu0 %v906
    %1229 = vmatprep.subr.bf16.mxu0 0
    %1230 = vmatpush1.bf16.msra.mxu0 %v905
    %1231 = vmatprep.subr.bf16.mxu0 0
    %1232 = vmatpush1.bf16.msra.mxu0 %v904
    %1233 = vmatprep.subr.bf16.mxu0 0
    %1234 = vmatpush2.bf16.msra.mxu0 %v919
    %1235 = vmatprep.subr.bf16.mxu0 0
    %1236 = vmatpush2.bf16.msra.mxu0 %v918
    %1237 = vmatprep.subr.bf16.mxu0 0
    %1238 = vmatpush2.bf16.msra.mxu0 %v917
    %1239 = vmatprep.subr.bf16.mxu0 0
    %1240 = vmatpush2.bf16.msra.mxu0 %v916
    %1241 = vmatprep.subr.bf16.mxu0 0
    %1242 = vmatpush2.bf16.msra.mxu0 %v915
    %1243 = vmatprep.subr.bf16.mxu0 0
    %1244 = vmatpush2.bf16.msra.mxu0 %v914
    %1245 = vmatprep.subr.bf16.mxu0 0
    %1246 = vmatpush2.bf16.msra.mxu0 %v913
    %1247 = vmatprep.subr.bf16.mxu0 0
    %1248 = vmatpush2.bf16.msra.mxu0 %v912
    %1249 = vmatprep.mubr.bf16.mxu0 %v82
    %1250 = vmatmul.mubr.bf16.gmra.mxu0 %v81
    %v1251 = vpop.f32.mrf.mxu0
    %v1252 = vadd.f32 %v1212, %v1251
    %v1253 = vpop.f32.mrf.mxu0
    %v1254 = vpop.f32.mrf.mxu0
    %v1255 = vpop.f32.mrf.mxu0
    %1256 = vdwg.mxu0
    %1257 = vmatprep.subr.bf16.mxu0 0
    %1258 = vmatpush1.bf16.msra.mxu0 %v927
    %1259 = vmatprep.subr.bf16.mxu0 0
    %1260 = vmatpush1.bf16.msra.mxu0 %v926
    %1261 = vmatprep.subr.bf16.mxu0 0
    %1262 = vmatpush1.bf16.msra.mxu0 %v925
    %1263 = vmatprep.subr.bf16.mxu0 0
    %1264 = vmatpush1.bf16.msra.mxu0 %v924
    %1265 = vmatprep.subr.bf16.mxu0 0
    %1266 = vmatpush1.bf16.msra.mxu0 %v923
    %1267 = vmatprep.subr.bf16.mxu0 0
    %1268 = vmatpush1.bf16.msra.mxu0 %v922
    %1269 = vmatprep.subr.bf16.mxu0 0
    %1270 = vmatpush1.bf16.msra.mxu0 %v921
    %1271 = vmatprep.subr.bf16.mxu0 0
    %1272 = vmatpush1.bf16.msra.mxu0 %v920
    %1273 = vmatprep.subr.bf16.mxu0 0
    %1274 = vmatpush2.bf16.msra.mxu0 %v935
    %1275 = vmatprep.subr.bf16.mxu0 0
    %1276 = vmatpush2.bf16.msra.mxu0 %v934
    %1277 = vmatprep.subr.bf16.mxu0 0
    %1278 = vmatpush2.bf16.msra.mxu0 %v933
    %1279 = vmatprep.subr.bf16.mxu0 0
    %1280 = vmatpush2.bf16.msra.mxu0 %v932
    %1281 = vmatprep.subr.bf16.mxu0 0
    %1282 = vmatpush2.bf16.msra.mxu0 %v931
    %1283 = vmatprep.subr.bf16.mxu0 0
    %1284 = vmatpush2.bf16.msra.mxu0 %v930
    %1285 = vmatprep.subr.bf16.mxu0 0
    %1286 = vmatpush2.bf16.msra.mxu0 %v929
    %1287 = vmatprep.subr.bf16.mxu0 0
    %1288 = vmatpush2.bf16.msra.mxu0 %v928
    %1289 = vmatprep.mubr.bf16.mxu0 %v84
    %1290 = vmatmul.mubr.bf16.gmra.mxu0 %v83
    %v1291 = vpop.f32.mrf.mxu0
    %v1292 = vadd.f32 %v1252, %v1291
    %v1293 = vpop.f32.mrf.mxu0
    %v1294 = vpop.f32.mrf.mxu0
    %v1295 = vpop.f32.mrf.mxu0
    %1296 = vdwg.mxu0
    %1297 = vmatprep.subr.bf16.mxu0 0
    %1298 = vmatpush1.bf16.msra.mxu0 %v943
    %1299 = vmatprep.subr.bf16.mxu0 0
    %1300 = vmatpush1.bf16.msra.mxu0 %v942
    %1301 = vmatprep.subr.bf16.mxu0 0
    %1302 = vmatpush1.bf16.msra.mxu0 %v941
    %1303 = vmatprep.subr.bf16.mxu0 0
    %1304 = vmatpush1.bf16.msra.mxu0 %v940
    %1305 = vmatprep.subr.bf16.mxu0 0
    %1306 = vmatpush1.bf16.msra.mxu0 %v939
    %1307 = vmatprep.subr.bf16.mxu0 0
    %1308 = vmatpush1.bf16.msra.mxu0 %v938
    %1309 = vmatprep.subr.bf16.mxu0 0
    %1310 = vmatpush1.bf16.msra.mxu0 %v937
    %1311 = vmatprep.subr.bf16.mxu0 0
    %1312 = vmatpush1.bf16.msra.mxu0 %v936
    %1313 = vmatprep.subr.bf16.mxu0 0
    %1314 = vmatpush2.bf16.msra.mxu0 %v951
    %1315 = vmatprep.subr.bf16.mxu0 0
    %1316 = vmatpush2.bf16.msra.mxu0 %v950
    %1317 = vmatprep.subr.bf16.mxu0 0
    %1318 = vmatpush2.bf16.msra.mxu0 %v949
    %1319 = vmatprep.subr.bf16.mxu0 0
    %1320 = vmatpush2.bf16.msra.mxu0 %v948
    %1321 = vmatprep.subr.bf16.mxu0 0
    %1322 = vmatpush2.bf16.msra.mxu0 %v947
    %1323 = vmatprep.subr.bf16.mxu0 0
    %1324 = vmatpush2.bf16.msra.mxu0 %v946
    %1325 = vmatprep.subr.bf16.mxu0 0
    %1326 = vmatpush2.bf16.msra.mxu0 %v945
    %1327 = vmatprep.subr.bf16.mxu0 0
    %1328 = vmatpush2.bf16.msra.mxu0 %v944
    %1329 = vmatprep.mubr.bf16.mxu0 %v86
    %1330 = vmatmul.mubr.bf16.gmra.mxu0 %v85
    %v1331 = vpop.f32.mrf.mxu0
    %v1332 = vadd.f32 %v1292, %v1331
    %v1333 = vpop.f32.mrf.mxu0
    %v1334 = vpop.f32.mrf.mxu0
    %v1335 = vpop.f32.mrf.mxu0
    %1336 = vdwg.mxu0
    %1337 = vmatprep.subr.bf16.mxu0 0
    %1338 = vmatpush1.bf16.msra.mxu0 %v959
    %1339 = vmatprep.subr.bf16.mxu0 0
    %1340 = vmatpush1.bf16.msra.mxu0 %v958
    %1341 = vmatprep.subr.bf16.mxu0 0
    %1342 = vmatpush1.bf16.msra.mxu0 %v957
    %1343 = vmatprep.subr.bf16.mxu0 0
    %1344 = vmatpush1.bf16.msra.mxu0 %v956
    %1345 = vmatprep.subr.bf16.mxu0 0
    %1346 = vmatpush1.bf16.msra.mxu0 %v955
    %1347 = vmatprep.subr.bf16.mxu0 0
    %1348 = vmatpush1.bf16.msra.mxu0 %v954
    %1349 = vmatprep.subr.bf16.mxu0 0
    %1350 = vmatpush1.bf16.msra.mxu0 %v953
    %1351 = vmatprep.subr.bf16.mxu0 0
    %1352 = vmatpush1.bf16.msra.mxu0 %v952
    %1353 = vmatprep.subr.bf16.mxu0 0
    %1354 = vmatpush2.bf16.msra.mxu0 %v967
    %1355 = vmatprep.subr.bf16.mxu0 0
    %1356 = vmatpush2.bf16.msra.mxu0 %v966
    %1357 = vmatprep.subr.bf16.mxu0 0
    %1358 = vmatpush2.bf16.msra.mxu0 %v965
    %1359 = vmatprep.subr.bf16.mxu0 0
    %1360 = vmatpush2.bf16.msra.mxu0 %v964
    %1361 = vmatprep.subr.bf16.mxu0 0
    %1362 = vmatpush2.bf16.msra.mxu0 %v963
    %1363 = vmatprep.subr.bf16.mxu0 0
    %1364 = vmatpush2.bf16.msra.mxu0 %v962
    %1365 = vmatprep.subr.bf16.mxu0 0
    %1366 = vmatpush2.bf16.msra.mxu0 %v961
    %1367 = vmatprep.subr.bf16.mxu0 0
    %1368 = vmatpush2.bf16.msra.mxu0 %v960
    %1369 = vmatprep.mubr.bf16.mxu0 %v88
    %1370 = vmatmul.mubr.bf16.gmra.mxu0 %v87
    %v1371 = vpop.f32.mrf.mxu0
    %v1372 = vadd.f32 %v1332, %v1371
    %v1373 = vpop.f32.mrf.mxu0
    %v1374 = vpop.f32.mrf.mxu0
    %v1375 = vpop.f32.mrf.mxu0
    %1376 = vdwg.mxu0
    %1377 = vmatprep.subr.bf16.mxu0 0
    %1378 = vmatpush1.bf16.msra.mxu0 %v975
    %1379 = vmatprep.subr.bf16.mxu0 0
    %1380 = vmatpush1.bf16.msra.mxu0 %v974
    %1381 = vmatprep.subr.bf16.mxu0 0
    %1382 = vmatpush1.bf16.msra.mxu0 %v973
    %1383 = vmatprep.subr.bf16.mxu0 0
    %1384 = vmatpush1.bf16.msra.mxu0 %v972
    %1385 = vmatprep.subr.bf16.mxu0 0
    %1386 = vmatpush1.bf16.msra.mxu0 %v971
    %1387 = vmatprep.subr.bf16.mxu0 0
    %1388 = vmatpush1.bf16.msra.mxu0 %v970
    %1389 = vmatprep.subr.bf16.mxu0 0
    %1390 = vmatpush1.bf16.msra.mxu0 %v969
    %1391 = vmatprep.subr.bf16.mxu0 0
    %1392 = vmatpush1.bf16.msra.mxu0 %v968
    %1393 = vmatprep.subr.bf16.mxu0 0
    %1394 = vmatpush2.bf16.msra.mxu0 %v983
    %1395 = vmatprep.subr.bf16.mxu0 0
    %1396 = vmatpush2.bf16.msra.mxu0 %v982
    %1397 = vmatprep.subr.bf16.mxu0 0
    %1398 = vmatpush2.bf16.msra.mxu0 %v981
    %1399 = vmatprep.subr.bf16.mxu0 0
    %1400 = vmatpush2.bf16.msra.mxu0 %v980
    %1401 = vmatprep.subr.bf16.mxu0 0
    %1402 = vmatpush2.bf16.msra.mxu0 %v979
    %1403 = vmatprep.subr.bf16.mxu0 0
    %1404 = vmatpush2.bf16.msra.mxu0 %v978
    %1405 = vmatprep.subr.bf16.mxu0 0
    %1406 = vmatpush2.bf16.msra.mxu0 %v977
    %1407 = vmatprep.subr.bf16.mxu0 0
    %1408 = vmatpush2.bf16.msra.mxu0 %v976
    %1409 = vmatprep.mubr.bf16.mxu0 %v90
    %1410 = vmatmul.mubr.bf16.gmra.mxu0 %v89
    %v1411 = vpop.f32.mrf.mxu0
    %v1412 = vadd.f32 %v1372, %v1411
    %v1413 = vpop.f32.mrf.mxu0
    %v1414 = vpop.f32.mrf.mxu0
    %v1415 = vpop.f32.mrf.mxu0
    %1416 = vdwg.mxu0
    %1417 = vmatprep.subr.bf16.mxu0 0
    %1418 = vmatpush1.bf16.msra.mxu0 %v991
    %1419 = vmatprep.subr.bf16.mxu0 0
    %1420 = vmatpush1.bf16.msra.mxu0 %v990
    %1421 = vmatprep.subr.bf16.mxu0 0
    %1422 = vmatpush1.bf16.msra.mxu0 %v989
    %1423 = vmatprep.subr.bf16.mxu0 0
    %1424 = vmatpush1.bf16.msra.mxu0 %v988
    %1425 = vmatprep.subr.bf16.mxu0 0
    %1426 = vmatpush1.bf16.msra.mxu0 %v987
    %1427 = vmatprep.subr.bf16.mxu0 0
    %1428 = vmatpush1.bf16.msra.mxu0 %v986
    %1429 = vmatprep.subr.bf16.mxu0 0
    %1430 = vmatpush1.bf16.msra.mxu0 %v985
    %1431 = vmatprep.subr.bf16.mxu0 0
    %1432 = vmatpush1.bf16.msra.mxu0 %v984
    %1433 = vmatprep.subr.bf16.mxu0 0
    %1434 = vmatpush2.bf16.msra.mxu0 %v999
    %1435 = vmatprep.subr.bf16.mxu0 0
    %1436 = vmatpush2.bf16.msra.mxu0 %v998
    %1437 = vmatprep.subr.bf16.mxu0 0
    %1438 = vmatpush2.bf16.msra.mxu0 %v997
    %1439 = vmatprep.subr.bf16.mxu0 0
    %1440 = vmatpush2.bf16.msra.mxu0 %v996
    %1441 = vmatprep.subr.bf16.mxu0 0
    %1442 = vmatpush2.bf16.msra.mxu0 %v995
    %1443 = vmatprep.subr.bf16.mxu0 0
    %1444 = vmatpush2.bf16.msra.mxu0 %v994
    %1445 = vmatprep.subr.bf16.mxu0 0
    %1446 = vmatpush2.bf16.msra.mxu0 %v993
    %1447 = vmatprep.subr.bf16.mxu0 0
    %1448 = vmatpush2.bf16.msra.mxu0 %v992
    %1449 = vmatprep.mubr.bf16.mxu0 %v92
    %1450 = vmatmul.mubr.bf16.gmra.mxu0 %v91
    %v1451 = vpop.f32.mrf.mxu0
    %v1452 = vadd.f32 %v1412, %v1451
    %v1453 = vpop.f32.mrf.mxu0
    %v1454 = vpop.f32.mrf.mxu0
    %v1455 = vpop.f32.mrf.mxu0
    %1456 = vdwg.mxu0
    %1457 = vmatprep.subr.bf16.mxu0 0
    %1458 = vmatpush1.bf16.msra.mxu0 0
    %1459 = vmatprep.subr.bf16.mxu0 0
    %1460 = vmatpush1.bf16.msra.mxu0 0
    %1461 = vmatprep.subr.bf16.mxu0 0
    %1462 = vmatpush1.bf16.msra.mxu0 0
    %1463 = vmatprep.subr.bf16.mxu0 0
    %1464 = vmatpush1.bf16.msra.mxu0 0
    %1465 = vmatprep.subr.bf16.mxu0 0
    %1466 = vmatpush1.bf16.msra.mxu0 0
    %1467 = vmatprep.subr.bf16.mxu0 0
    %1468 = vmatpush1.bf16.msra.mxu0 0
    %1469 = vmatprep.subr.bf16.mxu0 0
    %1470 = vmatpush1.bf16.msra.mxu0 0
    %1471 = vmatprep.subr.bf16.mxu0 0
    %1472 = vmatpush1.bf16.msra.mxu0 %v1135
    %1473 = vmatprep.subr.bf16.mxu0 0
    %1474 = vmatpush2.bf16.msra.mxu0 0
    %1475 = vmatprep.subr.bf16.mxu0 0
    %1476 = vmatpush2.bf16.msra.mxu0 0
    %1477 = vmatprep.subr.bf16.mxu0 0
    %1478 = vmatpush2.bf16.msra.mxu0 0
    %1479 = vmatprep.subr.bf16.mxu0 0
    %1480 = vmatpush2.bf16.msra.mxu0 0
    %1481 = vmatprep.subr.bf16.mxu0 0
    %1482 = vmatpush2.bf16.msra.mxu0 0
    %1483 = vmatprep.subr.bf16.mxu0 0
    %1484 = vmatpush2.bf16.msra.mxu0 0
    %1485 = vmatprep.subr.bf16.mxu0 0
    %1486 = vmatpush2.bf16.msra.mxu0 0
    %1487 = vmatprep.subr.bf16.mxu0 0
    %1488 = vmatpush2.bf16.msra.mxu0 0
    %1489 = vmatprep.mubr.bf16.mxu0 0
    %1490 = vmatmul.mubr.bf16.gmra.mxu0 %v1131
    %v1491 = vpop.f32.mrf.mxu0
    %v1492 = vadd.f32 %v1452, %v1491
    %v1493 = vpop.f32.mrf.mxu0
    %v1494 = vpop.f32.mrf.mxu0
    %v1495 = vpop.f32.mrf.mxu0
    %1496 = vdwg.mxu0
    %v1497 = vmax.f32 %v1492, 0.0
    %v1498 = vpack.c.bf16 %v1497, %v1497
    %v1499 = vld [vmem:[#allocation6] sm:$0xf]
    %v1500 = vld [vmem:[#allocation6 + $0x4] sm:$0xf]
    %v1501 = vld [vmem:[#allocation6 + $0x8] sm:$0xf]
    %v1502 = vld [vmem:[#allocation6 + $0xc] sm:$0xf]
    %v1503 = vld [vmem:[#allocation6 + $0x10] sm:$0xf]
    %v1504 = vld [vmem:[#allocation6 + $0x14] sm:$0xf]
    %v1505 = vld [vmem:[#allocation6 + $0x18] sm:$0xf]
    %v1506 = vld [vmem:[#allocation6 + $0x1c] sm:$0xf]
    %v1507 = vld [vmem:[#allocation6 + $0x20] sm:$0xf]
    %v1508 = vld [vmem:[#allocation6 + $0x24] sm:$0xf]
    %v1509 = vld [vmem:[#allocation6 + $0x28] sm:$0xf]
    %v1510 = vld [vmem:[#allocation6 + $0x2c] sm:$0xf]
    %v1511 = vld [vmem:[#allocation6 + $0x30] sm:$0xf]
    %v1512 = vld [vmem:[#allocation6 + $0x34] sm:$0xf]
    %v1513 = vld [vmem:[#allocation6 + $0x38] sm:$0xf]
    %v1514 = vld [vmem:[#allocation6 + $0x3c] sm:$0xf]
    %v1515 = vld [vmem:[%s4] sm:$0x1]
    %v1517 = vlaneseq
    %v1518 = vshrl.u32 %v1517, 7
    %v1519 = vsub.s32 0, %v1518
    %v1520 = vrot.slane %v1515, %v1519
    %v1538 = vunpack.c.l.b16 %v1499
    %v1539 = vunpack.c.l.b16 %v1500
    %v1540 = vunpack.c.l.b16 %v1501
    %v1541 = vunpack.c.l.b16 %v1502
    %v1542 = vunpack.c.l.b16 %v1503
    %v1543 = vunpack.c.l.b16 %v1504
    %v1544 = vunpack.c.l.b16 %v1505
    %v1545 = vunpack.c.l.b16 %v1506
    %v1546 = vunpack.c.l.b16 %v1507
    %v1547 = vunpack.c.l.b16 %v1508
    %v1548 = vunpack.c.l.b16 %v1509
    %v1549 = vunpack.c.l.b16 %v1510
    %v1550 = vunpack.c.l.b16 %v1511
    %v1551 = vunpack.c.l.b16 %v1512
    %v1552 = vunpack.c.l.b16 %v1513
    %v1553 = vunpack.c.l.b16 %v1514
    %v1554 = vpack.c.b16 %v1539, %v1538
    %v1555 = vpack.c.b16 %v1541, %v1540
    %v1556 = vpack.c.b16 %v1543, %v1542
    %v1557 = vpack.c.b16 %v1545, %v1544
    %v1558 = vpack.c.b16 %v1547, %v1546
    %v1559 = vpack.c.b16 %v1549, %v1548
    %v1560 = vpack.c.b16 %v1551, %v1550
    %v1561 = vpack.c.b16 %v1553, %v1552
    %1570 = vmatprep.subr.bf16.mxu0 0
    %1571 = vmatpush1.bf16.msra.mxu0 %v1561
    %1572 = vmatprep.subr.bf16.mxu0 0
    %1573 = vmatpush1.bf16.msra.mxu0 %v1560
    %1574 = vmatprep.subr.bf16.mxu0 0
    %1575 = vmatpush1.bf16.msra.mxu0 %v1559
    %1576 = vmatprep.subr.bf16.mxu0 0
    %1577 = vmatpush1.bf16.msra.mxu0 %v1558
    %1578 = vmatprep.subr.bf16.mxu0 0
    %1579 = vmatpush1.bf16.msra.mxu0 %v1557
    %1580 = vmatprep.subr.bf16.mxu0 0
    %1581 = vmatpush1.bf16.msra.mxu0 %v1556
    %1582 = vmatprep.subr.bf16.mxu0 0
    %1583 = vmatpush1.bf16.msra.mxu0 %v1555
    %1584 = vmatprep.subr.bf16.mxu0 0
    %1585 = vmatpush1.bf16.msra.mxu0 %v1554
    %1586 = vmatprep.subr.bf16.mxu0 0
    %1587 = vmatpush2.bf16.msra.mxu0 0
    %1588 = vmatprep.subr.bf16.mxu0 0
    %1589 = vmatpush2.bf16.msra.mxu0 0
    %1590 = vmatprep.subr.bf16.mxu0 0
    %1591 = vmatpush2.bf16.msra.mxu0 0
    %1592 = vmatprep.subr.bf16.mxu0 0
    %1593 = vmatpush2.bf16.msra.mxu0 0
    %1594 = vmatprep.subr.bf16.mxu0 0
    %1595 = vmatpush2.bf16.msra.mxu0 0
    %1596 = vmatprep.subr.bf16.mxu0 0
    %1597 = vmatpush2.bf16.msra.mxu0 0
    %1598 = vmatprep.subr.bf16.mxu0 0
    %1599 = vmatpush2.bf16.msra.mxu0 0
    %1600 = vmatprep.subr.bf16.mxu0 0
    %1601 = vmatpush2.bf16.msra.mxu0 0
    %1602 = vmatprep.mubr.bf16.mxu0 0
    %1603 = vmatmul.mubr.bf16.gmra.mxu0 %v1498
    %v1604 = vpop.f32.mrf.mxu0
    %v1605 = vadd.f32 %v1520, %v1604
    %v1606 = vpop.f32.mrf.mxu0
    %v1607 = vpop.f32.mrf.mxu0
    %v1608 = vpop.f32.mrf.mxu0
    %1609 = vdwg.mxu0
    %1610 = vst [vmem:[%s5] sm:$0xff] %v1605
    // Predicated region
    $region34: #{mlp_forward.1} parent=1 // pred_check
      _
    $region35: #{mlp_forward.1} parent=1 // pred_check_branch
      %1612 = sbr.rel (0) target = $region37
    $region36: #{mlp_forward.1} parent=1 // pred_region
      _
    $region37: #{mlp_forward.1} parent=1 // pred_fallthru
      _
    // Predicated region
    $region38: #{mlp_forward.1} parent=1 // pred_check
      _
    $region39: #{mlp_forward.1} parent=1 // pred_check_branch
      %1614 = sbr.rel (0) target = $region41
    $region40: #{mlp_forward.1} parent=1 // pred_region
      _
    $region41: #{mlp_forward.1} parent=1 // pred_fallthru
      _
    %1615 = vsyncpa [#allocation3], 1
    %1616 = vsyncpa [#allocation5], 1

</llo_original>
